<compile_context>
chip_gen: v6e
topology: v6e:2x2x1
jax: 0.10.0
libtpu: 0.0.40
codegen_flags: <defaults>
</compile_context>

<pallas_src>
import functools

import jax
import jax.numpy as jnp
from jax import lax
from jax.experimental import pallas as pl
from jax.experimental.pallas import tpu as pltpu


def _time2vec_kernel(n_sin, act_fn, tau_ref, w_ref, b_ref, wfc_ref, bfc_ref, o_ref):
    tau = tau_ref[...]                              # (1, TB)    batch on lanes
    z = w_ref[...] * tau + b_ref[...]               # (Hp, TB)   freqs on sublanes
    row = lax.broadcasted_iota(jnp.int32, z.shape, 0)
    # Rows 0..n_sin-1 are the periodic features, row n_sin is the linear
    # (w0, b0) row, rows > n_sin are zero padding (identity keeps them 0).
    act = jnp.where(row < n_sin, act_fn(z), z)      # (Hp, TB)

    # fc1: (2, Hp) @ (Hp, TB) — lane-dense N = batch; MXU is otherwise idle.
    y = jnp.dot(wfc_ref[...], act, preferred_element_type=jnp.float32)
    o_ref[...] = (y + bfc_ref[...]).astype(o_ref.dtype)  # (2, TB) lane-dense store


@functools.partial(jax.jit, static_argnames=("activation", "block_b"))
def time2vec_forward(tau, params, *, activation="sin", block_b=8192):
    """tau: (B, 1) float32. Returns (B, 2) float32 (same semantics as Time2Vec)."""
    B = tau.shape[0]
    H = params["w"].shape[1] + 1                     # total Time2Vec features
    n_sin = H - 1
    act_fn = jnp.sin if activation == "sin" else jnp.cos

    # ---- pack weights into the transposed (feature-on-sublane) layout --------
    # Rows 0..H-2 = w/b (sine), row H-1 = w0/b0 (linear), rows H..Hp-1 = zeros.
    Hp = ((H + 7) // 8) * 8                          # sublane-align the feature axis
    w_all = jnp.concatenate([params["w"], params["w0"]], axis=1).reshape(H, 1)
    b_all = jnp.concatenate([params["b"], params["b0"]], axis=0).reshape(H, 1)
    wfc = params["fc_w"]                             # (2, H) — nn.Linear weight (out, in)
    if Hp != H:
        w_all = jnp.pad(w_all, ((0, Hp - H), (0, 0)))
        b_all = jnp.pad(b_all, ((0, Hp - H), (0, 0)))
        wfc = jnp.pad(wfc, ((0, 0), (0, Hp - H)))    # zero columns: padding rows ignored
    bfc = params["fc_b"].reshape(2, 1)               # (2, 1)

    # ---- lane-dense, lane-aligned batch tiling --------------------------------
    lane = 128
    block_b = ((block_b + lane - 1) // lane) * lane
    # Cap the tile so the (Hp, TB) f32 intermediate stays around ~4 MiB of VMEM.
    tb_cap = max(lane, ((4 << 20) // (Hp * 4)) // lane * lane)
    tb_big = min(block_b, tb_cap)
    if B >= tb_big:
        TB = tb_big
    else:
        TB = ((B + lane - 1) // lane) * lane         # small B: one lane-aligned tile
    Bp = ((B + TB - 1) // TB) * TB                   # padded batch (multiple of TB)

    tau_row = tau.reshape(1, B)
    if Bp != B:
        tau_row = jnp.pad(tau_row, ((0, 0), (0, Bp - B)))

    grid = (Bp // TB,)
    out_t = pl.pallas_call(
        functools.partial(_time2vec_kernel, n_sin, act_fn),
        out_shape=jax.ShapeDtypeStruct((2, Bp), jnp.float32),
        grid_spec=pltpu.PrefetchScalarGridSpec(
            num_scalar_prefetch=0,
            grid=grid,
            in_specs=[
                pl.BlockSpec((1, TB), lambda i: (0, i)),    # tau (lane-dense batch)
                pl.BlockSpec((Hp, 1), lambda i: (0, 0)),    # packed w (freqs on sublanes)
                pl.BlockSpec((Hp, 1), lambda i: (0, 0)),    # packed b
                pl.BlockSpec((2, Hp), lambda i: (0, 0)),    # fc weight
                pl.BlockSpec((2, 1), lambda i: (0, 0)),     # fc bias
            ],
            out_specs=pl.BlockSpec((2, TB), lambda i: (0, i)),  # lane-dense output slab
        ),
        compiler_params=pltpu.CompilerParams(
            dimension_semantics=("parallel",)),              # shards across TCs on v7x
    )(tau_row, w_all, b_all, wfc, bfc)

    # Cheap wrapper-side re-layout back to the PyTorch (B, 2) convention.
    return out_t[:, :B].T


def time2vec_reference(tau, params, *, activation="sin"):
    """Pure-JAX reference matching the PyTorch forward exactly."""
    f = jnp.sin if activation == "sin" else jnp.cos
    v1 = f(tau @ params["w"] + params["b"])
    v2 = tau @ params["w0"] + params["b0"]
    h = jnp.concatenate([v1, v2], axis=-1)
    return h @ params["fc_w"].T + params["fc_b"]


def init_params(key, hidden_dim):
    k = jax.random.split(key, 6)
    return {
        "w0": jax.random.normal(k[0], (1, 1), jnp.float32),             # (in=1, 1)
        "b0": jax.random.normal(k[1], (1,), jnp.float32),
        "w": jax.random.normal(k[2], (1, hidden_dim - 1), jnp.float32),
        "b": jax.random.normal(k[3], (hidden_dim - 1,), jnp.float32),
        "fc_w": jax.random.normal(k[4], (2, hidden_dim), jnp.float32),  # Linear(H, 2)
        "fc_b": jax.random.normal(k[5], (2,), jnp.float32),
    }


if __name__ == "__main__":
    key = jax.random.PRNGKey(0)
    k_x, k_p = jax.random.split(key)

    B, HIDDEN = 8, 32
    tau = jax.random.normal(k_x, (B, 1), jnp.float32)
    params = init_params(k_p, HIDDEN)

    out = time2vec_forward(tau, params, activation="sin")
    out = jax.block_until_ready(out)

    ref = time2vec_reference(tau, params, activation="sin")
    assert out.shape == (B, 2)
    assert jnp.allclose(out, ref, atol=1e-5, rtol=1e-5), "sin mismatch vs reference"

    # Also exercise the cosine branch of the module.
    out_c = jax.block_until_ready(time2vec_forward(tau, params, activation="cos"))
    ref_c = time2vec_reference(tau, params, activation="cos")
    assert jnp.allclose(out_c, ref_c, atol=1e-5, rtol=1e-5), "cos mismatch vs reference"

    print("KERNEL_OK")
</pallas_src>

<mosaic_0001>
module attributes {stable_mosaic.version = 11 : i64} {
  func.func @_time2vec_kernel(%arg0: i32, %arg1: memref<1x128xf32, #tpu.memory_space<vmem>>, %arg2: memref<32x1xf32, #tpu.memory_space<vmem>>, %arg3: memref<32x1xf32, #tpu.memory_space<vmem>>, %arg4: memref<2x32xf32, #tpu.memory_space<vmem>>, %arg5: memref<2x1xf32, #tpu.memory_space<vmem>>, %arg6: memref<2x128xf32, #tpu.memory_space<vmem>>) attributes {dimension_semantics = [#tpu.dimension_semantics<parallel>], iteration_bounds = array<i64: 1>, scalar_prefetch = 0 : i64, scratch_operands = 0 : i64, tpu.core_type = #tpu.core_type<tc>, window_params = [{transform_indices = @transform_0, window_bounds = array<i64: 1, 128>}, {pipeline_mode = #tpu.pipeline_mode<synchronous>, transform_indices = @transform_1, window_bounds = array<i64: 32, 1>}, {pipeline_mode = #tpu.pipeline_mode<synchronous>, transform_indices = @transform_2, window_bounds = array<i64: 32, 1>}, {pipeline_mode = #tpu.pipeline_mode<synchronous>, transform_indices = @transform_3, window_bounds = array<i64: 2, 32>}, {pipeline_mode = #tpu.pipeline_mode<synchronous>, transform_indices = @transform_4, window_bounds = array<i64: 2, 1>}, {transform_indices = @transform_5, window_bounds = array<i64: 2, 128>}]} {
    %c0 = arith.constant 0 : index
    %c0_0 = arith.constant 0 : index
    %0 = vector.load %arg1[%c0, %c0_0] : memref<1x128xf32, #tpu.memory_space<vmem>>, vector<1x128xf32>
    %c0_1 = arith.constant 0 : index
    %c0_2 = arith.constant 0 : index
    %1 = vector.load %arg2[%c0_1, %c0_2] : memref<32x1xf32, #tpu.memory_space<vmem>>, vector<32x1xf32>
    %2 = vector.broadcast %1 : vector<32x1xf32> to vector<32x128xf32>
    %3 = vector.broadcast %0 : vector<1x128xf32> to vector<32x128xf32>
    %4 = arith.mulf %2, %3 : vector<32x128xf32>
    %c0_3 = arith.constant 0 : index
    %c0_4 = arith.constant 0 : index
    %5 = vector.load %arg3[%c0_3, %c0_4] : memref<32x1xf32, #tpu.memory_space<vmem>>, vector<32x1xf32>
    %6 = vector.broadcast %5 : vector<32x1xf32> to vector<32x128xf32>
    %7 = arith.addf %4, %6 : vector<32x128xf32>
    %8 = tpu.iota {dimensions = array<i32: 0>} : vector<32x128xi32>
    %c31_i32 = arith.constant 31 : i32
    %9 = vector.broadcast %c31_i32 : i32 to vector<32x128xi32>
    %10 = arith.cmpi slt, %8, %9 : vector<32x128xi32>
    %11 = math.sin %7 : vector<32x128xf32>
    %12 = arith.select %10, %11, %7 : vector<32x128xi1>, vector<32x128xf32>
    %c0_5 = arith.constant 0 : index
    %c0_6 = arith.constant 0 : index
    %13 = vector.load %arg4[%c0_5, %c0_6] : memref<2x32xf32, #tpu.memory_space<vmem>>, vector<2x32xf32>
    %cst = arith.constant dense<0.000000e+00> : vector<2x128xf32>
    %14 = tpu.matmul %13, %12, %cst {dimension_numbers = #tpu.dot_dimension_numbers<[1], [0], [0], [1], [0, 0, 1, 1], [], []>} : vector<2x32xf32>, vector<32x128xf32>, vector<2x128xf32> -> vector<2x128xf32>
    %c0_7 = arith.constant 0 : index
    %c0_8 = arith.constant 0 : index
    %15 = vector.load %arg5[%c0_7, %c0_8] : memref<2x1xf32, #tpu.memory_space<vmem>>, vector<2x1xf32>
    %16 = vector.broadcast %15 : vector<2x1xf32> to vector<2x128xf32>
    %17 = arith.addf %14, %16 : vector<2x128xf32>
    %c0_9 = arith.constant 0 : index
    %c0_10 = arith.constant 0 : index
    %18 = vector.load %arg6[%c0_9, %c0_10] : memref<2x128xf32, #tpu.memory_space<vmem>>, vector<2x128xf32>
    tpu.vector_store %arg6[%c0_9, %c0_10], %17 {strides = array<i32>} : memref<2x128xf32, #tpu.memory_space<vmem>>, vector<2x128xf32>,
    return
  }
  func.func @transform_0(%arg0: i32) -> (i32, i32) {
    %c0_i32 = arith.constant 0 : i32
    %c0_i32_0 = arith.constant 0 : i32
    return %c0_i32, %arg0 : i32, i32
  }
  func.func @transform_1(%arg0: i32) -> (i32, i32) {
    %c0_i32 = arith.constant 0 : i32
    %c0_i32_0 = arith.constant 0 : i32
    %c0_i32_1 = arith.constant 0 : i32
    return %c0_i32, %c0_i32_0 : i32, i32
  }
  func.func @transform_2(%arg0: i32) -> (i32, i32) {
    %c0_i32 = arith.constant 0 : i32
    %c0_i32_0 = arith.constant 0 : i32
    %c0_i32_1 = arith.constant 0 : i32
    return %c0_i32, %c0_i32_0 : i32, i32
  }
  func.func @transform_3(%arg0: i32) -> (i32, i32) {
    %c0_i32 = arith.constant 0 : i32
    %c0_i32_0 = arith.constant 0 : i32
    %c0_i32_1 = arith.constant 0 : i32
    return %c0_i32, %c0_i32_0 : i32, i32
  }
  func.func @transform_4(%arg0: i32) -> (i32, i32) {
    %c0_i32 = arith.constant 0 : i32
    %c0_i32_0 = arith.constant 0 : i32
    %c0_i32_1 = arith.constant 0 : i32
    return %c0_i32, %c0_i32_0 : i32, i32
  }
  func.func @transform_5(%arg0: i32) -> (i32, i32) {
    %c0_i32 = arith.constant 0 : i32
    %c0_i32_0 = arith.constant 0 : i32
    return %c0_i32, %arg0 : i32, i32
  }
}

</mosaic_0001>

<llo_original>
// kernel: time2vec_forward.1
$region0: #{time2vec_forward.1}
  #allocation0 [shape = 'u32[]', space=smem, size = 0x4, offset = 0x4, fixed_abs, tag = 'smem constant byte address 0x4 - core index']
  #allocation1 [shape = 'u32[144,128]{1,0:T(1,128)}', space=vmem, size = 0x12000, scoped, tag = 'internal scratch']
  %s0 = inlined_call_operand.vmem [shape: f32[1,128], index: 0, kind: input, shape index: {}]
  %s1 = inlined_call_operand.vmem [shape: f32[32,1], index: 1, kind: input, shape index: {}]
  %s2 = inlined_call_operand.vmem [shape: f32[32,1], index: 2, kind: input, shape index: {}]
  %s3 = inlined_call_operand.vmem [shape: f32[2,32], index: 3, kind: input, shape index: {}]
  %s4 = inlined_call_operand.vmem [shape: f32[2,1], index: 4, kind: input, shape index: {}]
  %s5 = inlined_call_operand.vmem [shape: f32[2,128], index: 5, kind: output, shape index: {}]
  %s6 = sld [smem:[#allocation0]]
  $region30: #{time2vec_forward.1} parent=0
    _
  %s8 = ssub.s32 1, %s6
  %s9 = scalar_select 0, %s8, %s6
  // Predicated region
  $region2: #{time2vec_forward.1} parent=0 // pred_check
    _
  $region3: #{time2vec_forward.1} parent=0 // pred_check_branch
    %11 = sbr.rel (0) target = $region5
  $region4: #{time2vec_forward.1} parent=0 // pred_region
    _
  $region5: #{time2vec_forward.1} parent=0 // pred_fallthru
    _
  // Predicated region
  $region6: #{time2vec_forward.1} parent=0 // pred_check
    _
  $region7: #{time2vec_forward.1} parent=0 // pred_check_branch
    %13 = sbr.rel (0) target = $region9
  $region8: #{time2vec_forward.1} parent=0 // pred_region
    _
  $region9: #{time2vec_forward.1} parent=0 // pred_fallthru
    _
  // Predicated region
  $region10: #{time2vec_forward.1} parent=0 // pred_check
    _
  $region11: #{time2vec_forward.1} parent=0 // pred_check_branch
    %15 = sbr.rel (0) target = $region13
  $region12: #{time2vec_forward.1} parent=0 // pred_region
    _
  $region13: #{time2vec_forward.1} parent=0 // pred_fallthru
    _
  // Predicated region
  $region14: #{time2vec_forward.1} parent=0 // pred_check
    _
  $region15: #{time2vec_forward.1} parent=0 // pred_check_branch
    %17 = sbr.rel (0) target = $region17
  $region16: #{time2vec_forward.1} parent=0 // pred_region
    _
  $region17: #{time2vec_forward.1} parent=0 // pred_fallthru
    _
  // Predicated region
  $region18: #{time2vec_forward.1} parent=0 // pred_check
    _
  $region19: #{time2vec_forward.1} parent=0 // pred_check_branch
    %19 = sbr.rel (0) target = $region21
  $region20: #{time2vec_forward.1} parent=0 // pred_region
    _
  $region21: #{time2vec_forward.1} parent=0 // pred_fallthru
    _
  %v20 = vld [vmem:[%s0] sm:$0x1]
  %v21 = vld [vmem:[%s1] sm:$0xff]
  %v22 = vld [vmem:[%s1 + $0x8] sm:$0xff]
  %v23 = vld [vmem:[%s1 + $0x10] sm:$0xff]
  %v24 = vld [vmem:[%s1 + $0x18] sm:$0xff]
  %26 = vset.pattern.permute.xlu0 0
  %27 = vperm.xlu0 %26, %v21
  %v28 = vpop.permute.xlu0 %27
  %31 = vset.pattern.permute.xlu0 0
  %32 = vperm.xlu0 %31, %v22
  %v33 = vpop.permute.xlu0 %32
  %36 = vset.pattern.permute.xlu0 0
  %37 = vperm.xlu0 %36, %v23
  %v38 = vpop.permute.xlu0 %37
  %41 = vset.pattern.permute.xlu0 0
  %42 = vperm.xlu0 %41, %v24
  %v43 = vpop.permute.xlu0 %42
  %v46 = vlaneseq
  %v47 = vshrl.u32 %v46, 7
  %v48 = vsub.s32 0, %v47
  %v49 = vrot.slane %v20, %v48
  %v51 = vmul.f32 %v28, %v49
  %v52 = vmul.f32 %v33, %v49
  %v53 = vmul.f32 %v38, %v49
  %v54 = vmul.f32 %v43, %v49
  %v55 = vld [vmem:[%s2] sm:$0xff]
  %v56 = vld [vmem:[%s2 + $0x8] sm:$0xff]
  %v57 = vld [vmem:[%s2 + $0x10] sm:$0xff]
  %v58 = vld [vmem:[%s2 + $0x18] sm:$0xff]
  %60 = vset.pattern.permute.xlu0 0
  %61 = vperm.xlu0 %60, %v55
  %v62 = vpop.permute.xlu0 %61
  %65 = vset.pattern.permute.xlu0 0
  %66 = vperm.xlu0 %65, %v56
  %v67 = vpop.permute.xlu0 %66
  %70 = vset.pattern.permute.xlu0 0
  %71 = vperm.xlu0 %70, %v57
  %v72 = vpop.permute.xlu0 %71
  %75 = vset.pattern.permute.xlu0 0
  %76 = vperm.xlu0 %75, %v58
  %v77 = vpop.permute.xlu0 %76
  %v79 = vadd.f32 %v51, %v62
  %v80 = vadd.f32 %v52, %v67
  %v81 = vadd.f32 %v53, %v72
  %v82 = vadd.f32 %v54, %v77
  %v83 = vlaneseq
  %v84 = vshrl.u32 %v83, 7
  %v85 = vadd.s32 %v84, 8
  %v86 = vadd.s32 %v84, 16
  %v87 = vadd.s32 %v84, 24
  %vm88 = vcmp.lt.s32.totalorder %v84, 31
  %vm89 = vcmp.lt.s32.totalorder %v85, 31
  %vm90 = vcmp.lt.s32.totalorder %v86, 31
  %vm91 = vcmp.lt.s32.totalorder %v87, 31
  %v92 = vand.u32 2147483647, %v79
  %vm93 = vcmp.le.f32.partialorder %v92, 0.7853982
  %vm94 = vcmp.lt.s32.totalorder %v79, 0
  %v95 = vand.u32 %v79, 2139095040
  %v96 = vshrl.u32 %v95, 23
  %v97 = vsub.s32 %v96, 127
  %v98 = vand.u32 2147483647, %v79
  %v99 = vand.u32 %v98, 8388607
  %v100 = vor.u32 %v99, 8388608
  %v101 = vsub.s32 0, %v100
  %v102 = vadd.s32 %v97, 1
  %vm103 = vcmp.gt.s32.totalorder %v102, 0
  %v104 = vsel %vm103, %v102, 0
  %v105 = vshrl.u32 %v104, 5
  %v106 = vand.u32 %v104, 31
  %v107 = vsub.s32 32, %v106
  %v108 = vshrl.u32 683565275, %v107
  %v109 = vshll.u32 683565275, %v106
  %v110 = vshrl.u32 2475754826, %v107
  %v111 = vor.u32 %v109, %v110
  %v112 = vshll.u32 2475754826, %v106
  %v113 = vshrl.u32 2131351028, %v107
  %v114 = vor.u32 %v112, %v113
  %v115 = vshll.u32 2131351028, %v106
  %v116 = vshrl.u32 2102212464, %v107
  %v117 = vor.u32 %v115, %v116
  %v118 = vshll.u32 2102212464, %v106
  %v119 = vshrl.u32 920167782, %v107
  %v120 = vor.u32 %v118, %v119
  %v121 = vshll.u32 920167782, %v106
  %v122 = vshrl.u32 1326507024, %v107
  %v123 = vor.u32 %v121, %v122
  %vm124 = vcmp.lt.s32.totalorder %v105, 1
  %vm125 = vcmp.lt.s32.totalorder %v105, 2
  %vm126 = vcmp.lt.s32.totalorder %v105, 3
  %vm127 = vcmp.lt.s32.totalorder %v105, 4
  %v128 = vsel %vm124, %v108, %v111
  %v129 = vsel %vm127, %v117, 2102212464
  %v130 = vsel %vm126, %v114, %v129
  %v131 = vsel %vm125, %v128, %v130
  %v132 = vsel %vm124, %v111, %v114
  %v133 = vsel %vm127, %v120, 920167782
  %v134 = vsel %vm126, %v117, %v133
  %v135 = vsel %vm125, %v132, %v134
  %v136 = vsel %vm124, %v114, %v117
  %v137 = vsel %vm127, %v123, 1326507024
  %v138 = vsel %vm126, %v120, %v137
  %v139 = vsel %vm125, %v136, %v138
  %v140 = vshll.u32 %v100, 8
  %v141 = vmul.u32.u64.compose %v140, %v139
  %v142 = vextract.low.u32 %v141
  %v143 = vextract.high.u32 %v141
  %v144 = vmul.u32.u64.compose %v140, %v135
  %v145 = vextract.low.u32 %v144
  %v146 = vextract.high.u32 %v144
  %v147 = vmul.u32 %v140, %v131
  %v148 = vadd.s32 %v143, %v145
  %vm149 = vc.u32 %v143, %v145
  %v150 = vadd.s32 %v146, 1
  %v151 = vsel %vm149, %v150, %v146
  %v152 = vadd.s32 %v147, %v151
  %v153 = vadd.s32 %v152, 536870912
  %v154 = vshrl.u32 %v153, 30
  %v155 = vshll.u32 %v154, 30
  %v156 = vsub.s32 %v152, %v155
  %vm157 = vcmp.lt.s32.totalorder %v156, 0
  %v158 = vsub.s32 0, %v156
  %v159 = vsel %vm157, %v158, %v156
  %v160 = vclz %v159
  %v161 = vsub.s32 %v160, 2
  %vm162 = vcmp.gt.s32.totalorder 0, %v161
  %v163 = vsel %vm162, 0, %v161
  %v164 = vsub.s32 32, %v163
  %v165 = vshll.u32 %v156, %v163
  %v166 = vshrl.u32 %v148, %v164
  %v167 = vor.u32 %v165, %v166
  %v168 = vsub.s32 4294967266, %v163
  %v169 = vadd.s32 %v168, 127
  %v170 = vshll.u32 %v169, 23
  %v171 = vor.u32 4788187, %v170
  %v172 = vand.u32 2147483647, %v171
  %v174 = vcvt.s32.f32 %v167
  %v175 = vmul.f32 %v174, %v172
  %v176 = vxor.u32 %v175, 2147483648
  %v177 = vsel %vm94, %v176, %v175
  %v178 = vsub.s32 4, %v154
  %v179 = vsel %vm94, %v178, %v154
  %v180 = vsel %vm93, %v79, %v177
  %v181 = vsel %vm93, 0, %v179
  %v182 = vcosq.f32.pop %v180
  %v183 = vsinq.f32.pop %v180
  %vm184 = vweird.f32 %v79
  %v185 = vadd.s32 %v181, 3
  %v186 = vand.u32 %v185, 3
  %vm187 = vcmp.lt.s32.totalorder %v186, 2
  %vm188 = vcmp.eq.s32.totalorder %v186, 0
  %v189 = vxor.u32 %v183, 2147483648
  %v190 = vsel %vm188, %v182, %v189
  %vm191 = vcmp.eq.s32.totalorder %v186, 2
  %v192 = vxor.u32 %v182, 2147483648
  %v193 = vsel %vm191, %v192, %v183
  %v194 = vsel %vm187, %v190, %v193
  %v195 = vsel %vm184, nan, %v194
  %v196 = vand.u32 2147483647, %v80
  %vm197 = vcmp.le.f32.partialorder %v196, 0.7853982
  %vm198 = vcmp.lt.s32.totalorder %v80, 0
  %v199 = vand.u32 %v80, 2139095040
  %v200 = vshrl.u32 %v199, 23
  %v201 = vsub.s32 %v200, 127
  %v202 = vand.u32 2147483647, %v80
  %v203 = vand.u32 %v202, 8388607
  %v204 = vor.u32 %v203, 8388608
  %v205 = vsub.s32 0, %v204
  %v206 = vadd.s32 %v201, 1
  %vm207 = vcmp.gt.s32.totalorder %v206, 0
  %v208 = vsel %vm207, %v206, 0
  %v209 = vshrl.u32 %v208, 5
  %v210 = vand.u32 %v208, 31
  %v211 = vsub.s32 32, %v210
  %v212 = vshrl.u32 683565275, %v211
  %v213 = vshll.u32 683565275, %v210
  %v214 = vshrl.u32 2475754826, %v211
  %v215 = vor.u32 %v213, %v214
  %v216 = vshll.u32 2475754826, %v210
  %v217 = vshrl.u32 2131351028, %v211
  %v218 = vor.u32 %v216, %v217
  %v219 = vshll.u32 2131351028, %v210
  %v220 = vshrl.u32 2102212464, %v211
  %v221 = vor.u32 %v219, %v220
  %v222 = vshll.u32 2102212464, %v210
  %v223 = vshrl.u32 920167782, %v211
  %v224 = vor.u32 %v222, %v223
  %v225 = vshll.u32 920167782, %v210
  %v226 = vshrl.u32 1326507024, %v211
  %v227 = vor.u32 %v225, %v226
  %vm228 = vcmp.lt.s32.totalorder %v209, 1
  %vm229 = vcmp.lt.s32.totalorder %v209, 2
  %vm230 = vcmp.lt.s32.totalorder %v209, 3
  %vm231 = vcmp.lt.s32.totalorder %v209, 4
  %v232 = vsel %vm228, %v212, %v215
  %v233 = vsel %vm231, %v221, 2102212464
  %v234 = vsel %vm230, %v218, %v233
  %v235 = vsel %vm229, %v232, %v234
  %v236 = vsel %vm228, %v215, %v218
  %v237 = vsel %vm231, %v224, 920167782
  %v238 = vsel %vm230, %v221, %v237
  %v239 = vsel %vm229, %v236, %v238
  %v240 = vsel %vm228, %v218, %v221
  %v241 = vsel %vm231, %v227, 1326507024
  %v242 = vsel %vm230, %v224, %v241
  %v243 = vsel %vm229, %v240, %v242
  %v244 = vshll.u32 %v204, 8
  %v245 = vmul.u32.u64.compose %v244, %v243
  %v246 = vextract.low.u32 %v245
  %v247 = vextract.high.u32 %v245
  %v248 = vmul.u32.u64.compose %v244, %v239
  %v249 = vextract.low.u32 %v248
  %v250 = vextract.high.u32 %v248
  %v251 = vmul.u32 %v244, %v235
  %v252 = vadd.s32 %v247, %v249
  %vm253 = vc.u32 %v247, %v249
  %v254 = vadd.s32 %v250, 1
  %v255 = vsel %vm253, %v254, %v250
  %v256 = vadd.s32 %v251, %v255
  %v257 = vadd.s32 %v256, 536870912
  %v258 = vshrl.u32 %v257, 30
  %v259 = vshll.u32 %v258, 30
  %v260 = vsub.s32 %v256, %v259
  %vm261 = vcmp.lt.s32.totalorder %v260, 0
  %v262 = vsub.s32 0, %v260
  %v263 = vsel %vm261, %v262, %v260
  %v264 = vclz %v263
  %v265 = vsub.s32 %v264, 2
  %vm266 = vcmp.gt.s32.totalorder 0, %v265
  %v267 = vsel %vm266, 0, %v265
  %v268 = vsub.s32 32, %v267
  %v269 = vshll.u32 %v260, %v267
  %v270 = vshrl.u32 %v252, %v268
  %v271 = vor.u32 %v269, %v270
  %v272 = vsub.s32 4294967266, %v267
  %v273 = vadd.s32 %v272, 127
  %v274 = vshll.u32 %v273, 23
  %v275 = vor.u32 4788187, %v274
  %v276 = vand.u32 2147483647, %v275
  %v278 = vcvt.s32.f32 %v271
  %v279 = vmul.f32 %v278, %v276
  %v280 = vxor.u32 %v279, 2147483648
  %v281 = vsel %vm198, %v280, %v279
  %v282 = vsub.s32 4, %v258
  %v283 = vsel %vm198, %v282, %v258
  %v284 = vsel %vm197, %v80, %v281
  %v285 = vsel %vm197, 0, %v283
  %v286 = vcosq.f32.pop %v284
  %v287 = vsinq.f32.pop %v284
  %vm288 = vweird.f32 %v80
  %v289 = vadd.s32 %v285, 3
  %v290 = vand.u32 %v289, 3
  %vm291 = vcmp.lt.s32.totalorder %v290, 2
  %vm292 = vcmp.eq.s32.totalorder %v290, 0
  %v293 = vxor.u32 %v287, 2147483648
  %v294 = vsel %vm292, %v286, %v293
  %vm295 = vcmp.eq.s32.totalorder %v290, 2
  %v296 = vxor.u32 %v286, 2147483648
  %v297 = vsel %vm295, %v296, %v287
  %v298 = vsel %vm291, %v294, %v297
  %v299 = vsel %vm288, nan, %v298
  %v300 = vand.u32 2147483647, %v81
  %vm301 = vcmp.le.f32.partialorder %v300, 0.7853982
  %vm302 = vcmp.lt.s32.totalorder %v81, 0
  %v303 = vand.u32 %v81, 2139095040
  %v304 = vshrl.u32 %v303, 23
  %v305 = vsub.s32 %v304, 127
  %v306 = vand.u32 2147483647, %v81
  %v307 = vand.u32 %v306, 8388607
  %v308 = vor.u32 %v307, 8388608
  %v309 = vsub.s32 0, %v308
  %v310 = vadd.s32 %v305, 1
  %vm311 = vcmp.gt.s32.totalorder %v310, 0
  %v312 = vsel %vm311, %v310, 0
  %v313 = vshrl.u32 %v312, 5
  %v314 = vand.u32 %v312, 31
  %v315 = vsub.s32 32, %v314
  %v316 = vshrl.u32 683565275, %v315
  %v317 = vshll.u32 683565275, %v314
  %v318 = vshrl.u32 2475754826, %v315
  %v319 = vor.u32 %v317, %v318
  %v320 = vshll.u32 2475754826, %v314
  %v321 = vshrl.u32 2131351028, %v315
  %v322 = vor.u32 %v320, %v321
  %v323 = vshll.u32 2131351028, %v314
  %v324 = vshrl.u32 2102212464, %v315
  %v325 = vor.u32 %v323, %v324
  %v326 = vshll.u32 2102212464, %v314
  %v327 = vshrl.u32 920167782, %v315
  %v328 = vor.u32 %v326, %v327
  %v329 = vshll.u32 920167782, %v314
  %v330 = vshrl.u32 1326507024, %v315
  %v331 = vor.u32 %v329, %v330
  %vm332 = vcmp.lt.s32.totalorder %v313, 1
  %vm333 = vcmp.lt.s32.totalorder %v313, 2
  %vm334 = vcmp.lt.s32.totalorder %v313, 3
  %vm335 = vcmp.lt.s32.totalorder %v313, 4
  %v336 = vsel %vm332, %v316, %v319
  %v337 = vsel %vm335, %v325, 2102212464
  %v338 = vsel %vm334, %v322, %v337
  %v339 = vsel %vm333, %v336, %v338
  %v340 = vsel %vm332, %v319, %v322
  %v341 = vsel %vm335, %v328, 920167782
  %v342 = vsel %vm334, %v325, %v341
  %v343 = vsel %vm333, %v340, %v342
  %v344 = vsel %vm332, %v322, %v325
  %v345 = vsel %vm335, %v331, 1326507024
  %v346 = vsel %vm334, %v328, %v345
  %v347 = vsel %vm333, %v344, %v346
  %v348 = vshll.u32 %v308, 8
  %v349 = vmul.u32.u64.compose %v348, %v347
  %v350 = vextract.low.u32 %v349
  %v351 = vextract.high.u32 %v349
  %v352 = vmul.u32.u64.compose %v348, %v343
  %v353 = vextract.low.u32 %v352
  %v354 = vextract.high.u32 %v352
  %v355 = vmul.u32 %v348, %v339
  %v356 = vadd.s32 %v351, %v353
  %vm357 = vc.u32 %v351, %v353
  %v358 = vadd.s32 %v354, 1
  %v359 = vsel %vm357, %v358, %v354
  %v360 = vadd.s32 %v355, %v359
  %v361 = vadd.s32 %v360, 536870912
  %v362 = vshrl.u32 %v361, 30
  %v363 = vshll.u32 %v362, 30
  %v364 = vsub.s32 %v360, %v363
  %vm365 = vcmp.lt.s32.totalorder %v364, 0
  %v366 = vsub.s32 0, %v364
  %v367 = vsel %vm365, %v366, %v364
  %v368 = vclz %v367
  %v369 = vsub.s32 %v368, 2
  %vm370 = vcmp.gt.s32.totalorder 0, %v369
  %v371 = vsel %vm370, 0, %v369
  %v372 = vsub.s32 32, %v371
  %v373 = vshll.u32 %v364, %v371
  %v374 = vshrl.u32 %v356, %v372
  %v375 = vor.u32 %v373, %v374
  %v376 = vsub.s32 4294967266, %v371
  %v377 = vadd.s32 %v376, 127
  %v378 = vshll.u32 %v377, 23
  %v379 = vor.u32 4788187, %v378
  %v380 = vand.u32 2147483647, %v379
  %v382 = vcvt.s32.f32 %v375
  %v383 = vmul.f32 %v382, %v380
  %v384 = vxor.u32 %v383, 2147483648
  %v385 = vsel %vm302, %v384, %v383
  %v386 = vsub.s32 4, %v362
  %v387 = vsel %vm302, %v386, %v362
  %v388 = vsel %vm301, %v81, %v385
  %v389 = vsel %vm301, 0, %v387
  %v390 = vcosq.f32.pop %v388
  %v391 = vsinq.f32.pop %v388
  %vm392 = vweird.f32 %v81
  %v393 = vadd.s32 %v389, 3
  %v394 = vand.u32 %v393, 3
  %vm395 = vcmp.lt.s32.totalorder %v394, 2
  %vm396 = vcmp.eq.s32.totalorder %v394, 0
  %v397 = vxor.u32 %v391, 2147483648
  %v398 = vsel %vm396, %v390, %v397
  %vm399 = vcmp.eq.s32.totalorder %v394, 2
  %v400 = vxor.u32 %v390, 2147483648
  %v401 = vsel %vm399, %v400, %v391
  %v402 = vsel %vm395, %v398, %v401
  %v403 = vsel %vm392, nan, %v402
  %v404 = vand.u32 2147483647, %v82
  %vm405 = vcmp.le.f32.partialorder %v404, 0.7853982
  %vm406 = vcmp.lt.s32.totalorder %v82, 0
  %v407 = vand.u32 %v82, 2139095040
  %v408 = vshrl.u32 %v407, 23
  %v409 = vsub.s32 %v408, 127
  %v410 = vand.u32 2147483647, %v82
  %v411 = vand.u32 %v410, 8388607
  %v412 = vor.u32 %v411, 8388608
  %v413 = vsub.s32 0, %v412
  %v414 = vadd.s32 %v409, 1
  %vm415 = vcmp.gt.s32.totalorder %v414, 0
  %v416 = vsel %vm415, %v414, 0
  %v417 = vshrl.u32 %v416, 5
  %v418 = vand.u32 %v416, 31
  %v419 = vsub.s32 32, %v418
  %v420 = vshrl.u32 683565275, %v419
  %v421 = vshll.u32 683565275, %v418
  %v422 = vshrl.u32 2475754826, %v419
  %v423 = vor.u32 %v421, %v422
  %v424 = vshll.u32 2475754826, %v418
  %v425 = vshrl.u32 2131351028, %v419
  %v426 = vor.u32 %v424, %v425
  %v427 = vshll.u32 2131351028, %v418
  %v428 = vshrl.u32 2102212464, %v419
  %v429 = vor.u32 %v427, %v428
  %v430 = vshll.u32 2102212464, %v418
  %v431 = vshrl.u32 920167782, %v419
  %v432 = vor.u32 %v430, %v431
  %v433 = vshll.u32 920167782, %v418
  %v434 = vshrl.u32 1326507024, %v419
  %v435 = vor.u32 %v433, %v434
  %vm436 = vcmp.lt.s32.totalorder %v417, 1
  %vm437 = vcmp.lt.s32.totalorder %v417, 2
  %vm438 = vcmp.lt.s32.totalorder %v417, 3
  %vm439 = vcmp.lt.s32.totalorder %v417, 4
  %v440 = vsel %vm436, %v420, %v423
  %v441 = vsel %vm439, %v429, 2102212464
  %v442 = vsel %vm438, %v426, %v441
  %v443 = vsel %vm437, %v440, %v442
  %v444 = vsel %vm436, %v423, %v426
  %v445 = vsel %vm439, %v432, 920167782
  %v446 = vsel %vm438, %v429, %v445
  %v447 = vsel %vm437, %v444, %v446
  %v448 = vsel %vm436, %v426, %v429
  %v449 = vsel %vm439, %v435, 1326507024
  %v450 = vsel %vm438, %v432, %v449
  %v451 = vsel %vm437, %v448, %v450
  %v452 = vshll.u32 %v412, 8
  %v453 = vmul.u32.u64.compose %v452, %v451
  %v454 = vextract.low.u32 %v453
  %v455 = vextract.high.u32 %v453
  %v456 = vmul.u32.u64.compose %v452, %v447
  %v457 = vextract.low.u32 %v456
  %v458 = vextract.high.u32 %v456
  %v459 = vmul.u32 %v452, %v443
  %v460 = vadd.s32 %v455, %v457
  %vm461 = vc.u32 %v455, %v457
  %v462 = vadd.s32 %v458, 1
  %v463 = vsel %vm461, %v462, %v458
  %v464 = vadd.s32 %v459, %v463
  %v465 = vadd.s32 %v464, 536870912
  %v466 = vshrl.u32 %v465, 30
  %v467 = vshll.u32 %v466, 30
  %v468 = vsub.s32 %v464, %v467
  %vm469 = vcmp.lt.s32.totalorder %v468, 0
  %v470 = vsub.s32 0, %v468
  %v471 = vsel %vm469, %v470, %v468
  %v472 = vclz %v471
  %v473 = vsub.s32 %v472, 2
  %vm474 = vcmp.gt.s32.totalorder 0, %v473
  %v475 = vsel %vm474, 0, %v473
  %v476 = vsub.s32 32, %v475
  %v477 = vshll.u32 %v468, %v475
  %v478 = vshrl.u32 %v460, %v476
  %v479 = vor.u32 %v477, %v478
  %v480 = vsub.s32 4294967266, %v475
  %v481 = vadd.s32 %v480, 127
  %v482 = vshll.u32 %v481, 23
  %v483 = vor.u32 4788187, %v482
  %v484 = vand.u32 2147483647, %v483
  %v486 = vcvt.s32.f32 %v479
  %v487 = vmul.f32 %v486, %v484
  %v488 = vxor.u32 %v487, 2147483648
  %v489 = vsel %vm406, %v488, %v487
  %v490 = vsub.s32 4, %v466
  %v491 = vsel %vm406, %v490, %v466
  %v492 = vsel %vm405, %v82, %v489
  %v493 = vsel %vm405, 0, %v491
  %v494 = vcosq.f32.pop %v492
  %v495 = vsinq.f32.pop %v492
  %vm496 = vweird.f32 %v82
  %v497 = vadd.s32 %v493, 3
  %v498 = vand.u32 %v497, 3
  %vm499 = vcmp.lt.s32.totalorder %v498, 2
  %vm500 = vcmp.eq.s32.totalorder %v498, 0
  %v501 = vxor.u32 %v495, 2147483648
  %v502 = vsel %vm500, %v494, %v501
  %vm503 = vcmp.eq.s32.totalorder %v498, 2
  %v504 = vxor.u32 %v494, 2147483648
  %v505 = vsel %vm503, %v504, %v495
  %v506 = vsel %vm499, %v502, %v505
  %v507 = vsel %vm496, nan, %v506
  %v508 = vsel %vm88, %v195, %v79
  %v509 = vsel %vm89, %v299, %v80
  %v510 = vsel %vm90, %v403, %v81
  %v511 = vsel %vm91, %v507, %v82
  %v512 = vld [vmem:[%s3] sm:$0x3]
  %v513 = vld [vmem:[%s4] sm:$0x3]
  %515 = vset.pattern.permute.xlu0 0
  %516 = vperm.xlu0 %515, %v513
  %v517 = vpop.permute.xlu0 %516
  %vm519 = vcmask 261120
  %v521 = vsel %vm519, %v512, 0
  %523 = vmatprep.subr.mxu0 0.0
  %524 = vmatpush1.msra.mxu0 0.0
  %525 = vmatprep.subr.mxu0 0.0
  %526 = vmatpush1.msra.mxu0 0.0
  %527 = vmatprep.subr.mxu0 0.0
  %528 = vmatpush1.msra.mxu0 0.0
  %529 = vmatprep.subr.mxu0 0.0
  %530 = vmatpush1.msra.mxu0 0.0
  %531 = vmatprep.subr.mxu0 0.0
  %532 = vmatpush1.msra.mxu0 0.0
  %533 = vmatprep.subr.mxu0 0.0
  %534 = vmatpush1.msra.mxu0 0.0
  %535 = vmatprep.subr.mxu0 0.0
  %536 = vmatpush1.msra.mxu0 0.0
  %537 = vmatprep.subr.mxu0 0.0
  %538 = vmatpush1.msra.mxu0 0.0
  %539 = vmatprep.subr.mxu0 0.0
  %540 = vmatpush1.msra.mxu0 0.0
  %541 = vmatprep.subr.mxu0 0.0
  %542 = vmatpush1.msra.mxu0 0.0
  %543 = vmatprep.subr.mxu0 0.0
  %544 = vmatpush1.msra.mxu0 0.0
  %545 = vmatprep.subr.mxu0 0.0
  %546 = vmatpush1.msra.mxu0 0.0
  %547 = vmatprep.subr.mxu0 0.0
  %548 = vmatpush1.msra.mxu0 %v511
  %549 = vmatprep.subr.mxu0 0.0
  %550 = vmatpush1.msra.mxu0 %v510
  %551 = vmatprep.subr.mxu0 0.0
  %552 = vmatpush1.msra.mxu0 %v509
  %553 = vmatprep.subr.mxu0 0.0
  %554 = vmatpush1.msra.mxu0 %v508
  %555 = vmatprep.subr.mxu0 0.0
  %556 = vmatpush2.msra.mxu0 0.0
  %557 = vmatprep.subr.mxu0 0.0
  %558 = vmatpush2.msra.mxu0 0.0
  %559 = vmatprep.subr.mxu0 0.0
  %560 = vmatpush2.msra.mxu0 0.0
  %561 = vmatprep.subr.mxu0 0.0
  %562 = vmatpush2.msra.mxu0 0.0
  %563 = vmatprep.subr.mxu0 0.0
  %564 = vmatpush2.msra.mxu0 0.0
  %565 = vmatprep.subr.mxu0 0.0
  %566 = vmatpush2.msra.mxu0 0.0
  %567 = vmatprep.subr.mxu0 0.0
  %568 = vmatpush2.msra.mxu0 0.0
  %569 = vmatprep.subr.mxu0 0.0
  %570 = vmatpush2.msra.mxu0 0.0
  %571 = vmatprep.subr.mxu0 0.0
  %572 = vmatpush2.msra.mxu0 0.0
  %573 = vmatprep.subr.mxu0 0.0
  %574 = vmatpush2.msra.mxu0 0.0
  %575 = vmatprep.subr.mxu0 0.0
  %576 = vmatpush2.msra.mxu0 0.0
  %577 = vmatprep.subr.mxu0 0.0
  %578 = vmatpush2.msra.mxu0 0.0
  %579 = vmatprep.subr.mxu0 0.0
  %580 = vmatpush2.msra.mxu0 0.0
  %581 = vmatprep.subr.mxu0 0.0
  %582 = vmatpush2.msra.mxu0 0.0
  %583 = vmatprep.subr.mxu0 0.0
  %584 = vmatpush2.msra.mxu0 0.0
  %585 = vmatprep.subr.mxu0 0.0
  %586 = vmatpush2.msra.mxu0 0.0
  %587 = vmatprep.mubr.f32.mxu0 0.0
  %588 = vmatmul.mubr.f32.gmra.mxu0 %v521
  %v589 = vpop.f32.mrf.mxu0
  %v590 = vadd.f32 %v517, %v589
  %v591 = vpop.f32.mrf.mxu0
  %592 = vdwg.mxu0
  %593 = vst [vmem:[%s5] sm:$0x3] %v590
  // Predicated region
  $region22: #{time2vec_forward.1} parent=0 // pred_check
    _
  $region23: #{time2vec_forward.1} parent=0 // pred_check_branch
    %595 = sbr.rel (0) target = $region25
  $region24: #{time2vec_forward.1} parent=0 // pred_region
    _
  $region25: #{time2vec_forward.1} parent=0 // pred_fallthru
    _
  // Predicated region
  $region26: #{time2vec_forward.1} parent=0 // pred_check
    _
  $region27: #{time2vec_forward.1} parent=0 // pred_check_branch
    %597 = sbr.rel (0) target = $region29
  $region28: #{time2vec_forward.1} parent=0 // pred_region
    _
  $region29: #{time2vec_forward.1} parent=0 // pred_fallthru
    _

</llo_original>
